<compile_context>
chip_gen: v7x
topology: tpu7x:2x2x1
jax: 0.10.0
libtpu: 0.0.40
codegen_flags: <defaults>
</compile_context>

<pallas_src>
import jax
import jax.numpy as jnp
from jax.experimental import pallas as pl
from jax.experimental.pallas import tpu as pltpu


def _round_up(x, m):
    return ((x + m - 1) // m) * m


# ----------------------------------------------------------------------------
# Kernel 1: fused twin-head MLP.  xu tile [TB, D_in] -> out tile [TB, OUT]
# where out[:, :R] = Q1(xu), out[:, R:2R] = Q2(xu), rest zero-padding.
# ----------------------------------------------------------------------------
def _qnet_fused_kernel(xu_ref, w1_ref, b1_ref, w2_ref, b2_ref, w3_ref, b3_ref,
                       out_ref):
    h = jnp.dot(xu_ref[...], w1_ref[...],
                preferred_element_type=jnp.float32) + b1_ref[...]
    h = jnp.maximum(h, 0.0)
    h = jnp.dot(h, w2_ref[...],
                preferred_element_type=jnp.float32) + b2_ref[...]
    h = jnp.maximum(h, 0.0)
    out = jnp.dot(h, w3_ref[...],
                  preferred_element_type=jnp.float32) + b3_ref[...]
    out_ref[...] = out.astype(out_ref.dtype)


def qnet_fused(xu, pk, *, tile_b=512):
    """Both Q heads on xu [B, D_in] -> (x1, x2), each [B, R]."""
    B, D_in = xu.shape
    OUT, R = pk["OUT"], pk["R"]
    TB = B if B <= tile_b else tile_b          # full dim, or multiple of 8
    Bp = _round_up(B, TB)
    if Bp != B:
        xu = jnp.pad(xu, ((0, Bp - B), (0, 0)))

    def _full(a):
        return pl.BlockSpec(a.shape, lambda i: (0, 0))   # VMEM-resident params

    out = pl.pallas_call(
        _qnet_fused_kernel,
        grid=(Bp // TB,),
        in_specs=[pl.BlockSpec((TB, D_in), lambda i: (i, 0)),
                  _full(pk["W1"]), _full(pk["b1"]),
                  _full(pk["W2"]), _full(pk["b2"]),
                  _full(pk["W3"]), _full(pk["b3"])],
        out_specs=pl.BlockSpec((TB, OUT), lambda i: (i, 0)),
        out_shape=jax.ShapeDtypeStruct((Bp, OUT), jnp.float32),
        compiler_params=pltpu.CompilerParams(
            dimension_semantics=("parallel",),
            vmem_limit_bytes=32 * 1024 * 1024),
    )(xu, pk["W1"], pk["b1"], pk["W2"], pk["b2"], pk["W3"], pk["b3"])
    return out[:B, :R], out[:B, R:2 * R]


# ----------------------------------------------------------------------------
# Kernel 2: h_op pairwise projections.
# For sa-row tile i and candidate-w tile j it computes (without any HBM
# round trip of the O(B^2) intermediates):
#   q[i,j,:]    = [Q1([sa_i, w_j]) | Q2([sa_i, w_j])]  (lane-padded to OUT)
#   proj1[i,j]  = sum_r q[i,j,r]     * w[i,r]
#   proj2[i,j]  = sum_r q[i,j,R + r] * w[i,r]
# ----------------------------------------------------------------------------
def _qnet_proj_kernel(sa_ref, wq_ref, wm1_ref, wm2_ref,
                      w1sa_ref, w1w_ref, b1_ref, w2_ref, b2_ref, w3_ref, b3_ref,
                      proj1_ref, proj2_ref):
    TI = sa_ref.shape[0]
    TJ = wq_ref.shape[0]

    # layer 1: split into sa-contribution (per i) and w-contribution (per j)
    a = jnp.dot(sa_ref[...], w1sa_ref[...],
                preferred_element_type=jnp.float32) + b1_ref[...]   # [TI, 2H]
    c = jnp.dot(wq_ref[...], w1w_ref[...],
                preferred_element_type=jnp.float32)                 # [TJ, 2H]
    h = jnp.maximum(a[:, None, :] + c[None, :, :], 0.0)             # [TI,TJ,2H]
    h = h.reshape(TI * TJ, h.shape[-1])

    # layers 2 & 3 (both heads fused via block-diagonal packed weights)
    h = jnp.maximum(jnp.dot(h, w2_ref[...],
                            preferred_element_type=jnp.float32) + b2_ref[...],
                    0.0)
    q = jnp.dot(h, w3_ref[...],
                preferred_element_type=jnp.float32) + b3_ref[...]   # [TI*TJ,OUT]
    q = q.reshape(TI, TJ, -1)

    # project with the row-i preference vector (lane masks built in wrapper)
    wm1 = wm1_ref[...]                                              # [TI, OUT]
    wm2 = wm2_ref[...]
    proj1_ref[...] = jnp.sum(q * wm1[:, None, :], axis=-1)
    proj2_ref[...] = jnp.sum(q * wm2[:, None, :], axis=-1)


def qnet_pairwise_proj(sa, w, pk, *, tile_i=32, tile_j=128):
    """proj1, proj2 : [B, B] with proj_k[i, j] = w_i . Qk([sa_i, w_j])."""
    B, SA = sa.shape
    R, OUT, H = pk["R"], pk["OUT"], pk["H"]

    TI = min(_round_up(B, 8), tile_i)
    TJ = min(_round_up(B, 8), tile_j)
    Bi = _round_up(B, TI)
    Bj = _round_up(B, TJ)

    sa_p = jnp.pad(sa, ((0, Bi - B), (0, 0)))
    wq = jnp.pad(w, ((0, Bj - B), (0, 0)))                 # candidate w (per j)
    wm1 = jnp.zeros((Bi, OUT), jnp.float32).at[:B, :R].set(w)       # head-1 mask
    wm2 = jnp.zeros((Bi, OUT), jnp.float32).at[:B, R:2 * R].set(w)  # head-2 mask

    W1sa = pk["W1"][:SA, :]      # [SA, 2H]
    W1w = pk["W1"][SA:, :]       # [R, 2H]

    def _full(a):
        return pl.BlockSpec(a.shape, lambda i, j: (0, 0))

    proj1, proj2 = pl.pallas_call(
        _qnet_proj_kernel,
        grid=(Bi // TI, Bj // TJ),
        in_specs=[pl.BlockSpec((TI, SA), lambda i, j: (i, 0)),
                  pl.BlockSpec((TJ, R), lambda i, j: (j, 0)),
                  pl.BlockSpec((TI, OUT), lambda i, j: (i, 0)),
                  pl.BlockSpec((TI, OUT), lambda i, j: (i, 0)),
                  _full(W1sa), _full(W1w), _full(pk["b1"]),
                  _full(pk["W2"]), _full(pk["b2"]),
                  _full(pk["W3"]), _full(pk["b3"])],
        out_specs=(pl.BlockSpec((TI, TJ), lambda i, j: (i, j)),
                   pl.BlockSpec((TI, TJ), lambda i, j: (i, j))),
        out_shape=(jax.ShapeDtypeStruct((Bi, Bj), jnp.float32),
                   jax.ShapeDtypeStruct((Bi, Bj), jnp.float32)),
        compiler_params=pltpu.CompilerParams(
            dimension_semantics=("parallel", "parallel"),
            vmem_limit_bytes=32 * 1024 * 1024),
    )(sa_p, wq, wm1, wm2, W1sa, W1w, pk["b1"], pk["W2"], pk["b2"],
      pk["W3"], pk["b3"])
    return proj1[:B, :B], proj2[:B, :B]


# ----------------------------------------------------------------------------
# Parameter init (mirrors __init__: xavier_uniform_(gain=1) weights, zero bias)
# and packing into the fused layout consumed by the kernels.
# ----------------------------------------------------------------------------
def _xavier_uniform(key, fan_in, fan_out):
    bound = float(jnp.sqrt(6.0 / (fan_in + fan_out)))
    # stored [in, out] (transpose of torch's [out, in]); same distribution
    return jax.random.uniform(key, (fan_in, fan_out), jnp.float32, -bound, bound)


def init_qnetwork(key, num_inputs, num_actions, rwd_dim, hidden_dim):
    d_in = num_inputs + num_actions + rwd_dim
    dims = [(d_in, hidden_dim), (hidden_dim, hidden_dim), (hidden_dim, rwd_dim)]
    keys = jax.random.split(key, 6)
    params = {}
    for qi, name in enumerate(("q1", "q2")):
        layers = []
        for li, (fi, fo) in enumerate(dims):
            w = _xavier_uniform(keys[qi * 3 + li], fi, fo)
            b = jnp.zeros((1, fo), jnp.float32)
            layers.append((w, b))
        params[name] = layers
    return params


def pack_qnet_params(params):
    (w1a, b1a), (w2a, b2a), (w3a, b3a) = params["q1"]
    (w1b, b1b), (w2b, b2b), (w3b, b3b) = params["q2"]
    D_in, H = w1a.shape
    R = w3a.shape[1]
    OUT = _round_up(2 * R, 128)                       # lane-dense output width

    W1 = jnp.concatenate([w1a, w1b], axis=1)          # [D_in, 2H]
    b1 = jnp.concatenate([b1a, b1b], axis=1)          # [1, 2H]
    W2 = jnp.zeros((2 * H, 2 * H), jnp.float32)
    W2 = W2.at[:H, :H].set(w2a).at[H:, H:].set(w2b)   # block-diagonal
    b2 = jnp.concatenate([b2a, b2b], axis=1)          # [1, 2H]
    W3 = jnp.zeros((2 * H, OUT), jnp.float32)
    W3 = W3.at[:H, :R].set(w3a).at[H:, R:2 * R].set(w3b)
    b3 = jnp.zeros((1, OUT), jnp.float32)
    b3 = b3.at[:, :R].set(b3a).at[:, R:2 * R].set(b3b)
    return dict(W1=W1, b1=b1, W2=W2, b2=b2, W3=W3, b3=b3,
                D_in=D_in, H=H, R=R, OUT=OUT)


# ----------------------------------------------------------------------------
# Forward (both branches of QNetwork.forward)
# ----------------------------------------------------------------------------
def qnetwork_forward(pk, state, action, w, h_op=False):
    if not h_op:
        xu = jnp.concatenate([state, action, w], axis=1)
        return qnet_fused(xu, pk)

    # h_op branch (batch_size == n_weight, as in the PyTorch code)
    B = state.shape[0]
    sa = jnp.concatenate([state, action], axis=1)
    proj1, proj2 = qnet_pairwise_proj(sa, w, pk)       # [B, B] each

    max_proj_1 = jnp.max(proj1, axis=1)
    max_proj_2 = jnp.max(proj2, axis=1)
    max_id_1 = jnp.argmax(proj1, axis=1)
    max_id_2 = jnp.argmax(proj2, axis=1)
    first_net_smaller = (max_proj_1 < max_proj_2)[:, None]

    xu_both = jnp.concatenate(
        [jnp.concatenate([state, action, w[max_id_1]], axis=1),
         jnp.concatenate([state, action, w[max_id_2]], axis=1)], axis=0)
    x1_all, x2_all = qnet_fused(xu_both, pk)
    q1_max = x1_all[:B]          # Q1 on xu with w[max_id_1]
    q2_max = x2_all[B:]          # Q2 on xu with w[max_id_2]
    return jnp.where(first_net_smaller, q1_max, q2_max)


# ----------------------------------------------------------------------------
# Pure-JAX reference (for correctness checking only)
# ----------------------------------------------------------------------------
def _ref_mlp(layers, x):
    (w1, b1), (w2, b2), (w3, b3) = layers
    h = jnp.maximum(x @ w1 + b1, 0.0)
    h = jnp.maximum(h @ w2 + b2, 0.0)
    return h @ w3 + b3


def qnetwork_forward_ref(params, state, action, w, h_op=False):
    if not h_op:
        xu = jnp.concatenate([state, action, w], axis=1)
        return _ref_mlp(params["q1"], xu), _ref_mlp(params["q2"], xu)
    B = state.shape[0]
    sa = jnp.concatenate([state, action], axis=1)
    xu_e = jnp.concatenate(
        [jnp.broadcast_to(sa[:, None, :], (B, B, sa.shape[1])),
         jnp.broadcast_to(w[None, :, :], (B, B, w.shape[1]))], axis=-1)
    q1e = _ref_mlp(params["q1"], xu_e)
    q2e = _ref_mlp(params["q2"], xu_e)
    proj1 = jnp.sum(w[:, None, :] * q1e, axis=-1)
    proj2 = jnp.sum(w[:, None, :] * q2e, axis=-1)
    max_id_1 = jnp.argmax(proj1, axis=1)
    max_id_2 = jnp.argmax(proj2, axis=1)
    mask = (jnp.max(proj1, axis=1) < jnp.max(proj2, axis=1))[:, None]
    q1_max = _ref_mlp(params["q1"],
                      jnp.concatenate([state, action, w[max_id_1]], axis=1))
    q2_max = _ref_mlp(params["q2"],
                      jnp.concatenate([state, action, w[max_id_2]], axis=1))
    return jnp.where(mask, q1_max, q2_max)


if __name__ == "__main__":
    num_inputs, num_actions, rwd_dim, hidden_dim = 8, 4, 4, 32
    batch = 4  # also n_weight for the h_op branch

    root = jax.random.PRNGKey(0)
    k_params, k_s, k_a, k_w = jax.random.split(root, 4)

    params = init_qnetwork(k_params, num_inputs, num_actions, rwd_dim, hidden_dim)
    packed = pack_qnet_params(params)

    state = jax.random.normal(k_s, (batch, num_inputs), jnp.float32)
    action = jax.random.normal(k_a, (batch, num_actions), jnp.float32)
    w = jax.random.uniform(k_w, (batch, rwd_dim), jnp.float32)

    x1, x2 = qnetwork_forward(packed, state, action, w, h_op=False)
    q = qnetwork_forward(packed, state, action, w, h_op=True)
    jax.block_until_ready((x1, x2, q))

    # correctness vs pure-JAX reference
    x1_r, x2_r = qnetwork_forward_ref(params, state, action, w, h_op=False)
    q_r = qnetwork_forward_ref(params, state, action, w, h_op=True)

    assert x1.shape == (batch, rwd_dim) and x2.shape == (batch, rwd_dim)
    assert q.shape == (batch, rwd_dim)
    assert jnp.allclose(x1, x1_r, atol=1e-4, rtol=1e-4)
    assert jnp.allclose(x2, x2_r, atol=1e-4, rtol=1e-4)
    assert jnp.allclose(q, q_r, atol=1e-3, rtol=1e-3)
    print("KERNEL_OK")
</pallas_src>

<mosaic_0001>
module attributes {stable_mosaic.version = 11 : i64} {
  func.func @_qnet_fused_kernel(%arg0: i32, %arg1: memref<4x16xf32, #tpu.memory_space<vmem>>, %arg2: memref<16x64xf32, #tpu.memory_space<vmem>>, %arg3: memref<1x64xf32, #tpu.memory_space<vmem>>, %arg4: memref<64x64xf32, #tpu.memory_space<vmem>>, %arg5: memref<1x64xf32, #tpu.memory_space<vmem>>, %arg6: memref<64x128xf32, #tpu.memory_space<vmem>>, %arg7: memref<1x128xf32, #tpu.memory_space<vmem>>, %arg8: memref<4x128xf32, #tpu.memory_space<vmem>>) attributes {dimension_semantics = [#tpu.dimension_semantics<parallel>], iteration_bounds = array<i64: 1>, scalar_prefetch = 0 : i64, scratch_operands = 0 : i64, tpu.core_type = #tpu.core_type<tc>, window_params = [{transform_indices = @transform_0, window_bounds = array<i64: 4, 16>}, {pipeline_mode = #tpu.pipeline_mode<synchronous>, transform_indices = @transform_1, window_bounds = array<i64: 16, 64>}, {pipeline_mode = #tpu.pipeline_mode<synchronous>, transform_indices = @transform_2, window_bounds = array<i64: 1, 64>}, {pipeline_mode = #tpu.pipeline_mode<synchronous>, transform_indices = @transform_3, window_bounds = array<i64: 64, 64>}, {pipeline_mode = #tpu.pipeline_mode<synchronous>, transform_indices = @transform_4, window_bounds = array<i64: 1, 64>}, {pipeline_mode = #tpu.pipeline_mode<synchronous>, transform_indices = @transform_5, window_bounds = array<i64: 64, 128>}, {pipeline_mode = #tpu.pipeline_mode<synchronous>, transform_indices = @transform_6, window_bounds = array<i64: 1, 128>}, {transform_indices = @transform_7, window_bounds = array<i64: 4, 128>}]} {
    %c0 = arith.constant 0 : index
    %c0_0 = arith.constant 0 : index
    %0 = vector.load %arg1[%c0, %c0_0] : memref<4x16xf32, #tpu.memory_space<vmem>>, vector<4x16xf32>
    %c0_1 = arith.constant 0 : index
    %c0_2 = arith.constant 0 : index
    %1 = vector.load %arg2[%c0_1, %c0_2] : memref<16x64xf32, #tpu.memory_space<vmem>>, vector<16x64xf32>
    %cst = arith.constant dense<0.000000e+00> : vector<4x64xf32>
    %2 = tpu.matmul %0, %1, %cst {dimension_numbers = #tpu.dot_dimension_numbers<[1], [0], [0], [1], [0, 0, 1, 1], [], []>} : vector<4x16xf32>, vector<16x64xf32>, vector<4x64xf32> -> vector<4x64xf32>
    %c0_3 = arith.constant 0 : index
    %c0_4 = arith.constant 0 : index
    %3 = vector.load %arg3[%c0_3, %c0_4] : memref<1x64xf32, #tpu.memory_space<vmem>>, vector<1x64xf32>
    %4 = vector.broadcast %3 : vector<1x64xf32> to vector<4x64xf32>
    %5 = arith.addf %2, %4 : vector<4x64xf32>
    %cst_5 = arith.constant 0.000000e+00 : f32
    %6 = vector.broadcast %cst_5 : f32 to vector<4x64xf32>
    %7 = arith.maximumf %5, %6 : vector<4x64xf32>
    %c0_6 = arith.constant 0 : index
    %c0_7 = arith.constant 0 : index
    %8 = vector.load %arg4[%c0_6, %c0_7] : memref<64x64xf32, #tpu.memory_space<vmem>>, vector<64x64xf32>
    %cst_8 = arith.constant dense<0.000000e+00> : vector<4x64xf32>
    %9 = tpu.matmul %7, %8, %cst_8 {dimension_numbers = #tpu.dot_dimension_numbers<[1], [0], [0], [1], [0, 0, 1, 1], [], []>} : vector<4x64xf32>, vector<64x64xf32>, vector<4x64xf32> -> vector<4x64xf32>
    %c0_9 = arith.constant 0 : index
    %c0_10 = arith.constant 0 : index
    %10 = vector.load %arg5[%c0_9, %c0_10] : memref<1x64xf32, #tpu.memory_space<vmem>>, vector<1x64xf32>
    %11 = vector.broadcast %10 : vector<1x64xf32> to vector<4x64xf32>
    %12 = arith.addf %9, %11 : vector<4x64xf32>
    %cst_11 = arith.constant 0.000000e+00 : f32
    %13 = vector.broadcast %cst_11 : f32 to vector<4x64xf32>
    %14 = arith.maximumf %12, %13 : vector<4x64xf32>
    %c0_12 = arith.constant 0 : index
    %c0_13 = arith.constant 0 : index
    %15 = vector.load %arg6[%c0_12, %c0_13] : memref<64x128xf32, #tpu.memory_space<vmem>>, vector<64x128xf32>
    %cst_14 = arith.constant dense<0.000000e+00> : vector<4x128xf32>
    %16 = tpu.matmul %14, %15, %cst_14 {dimension_numbers = #tpu.dot_dimension_numbers<[1], [0], [0], [1], [0, 0, 1, 1], [], []>} : vector<4x64xf32>, vector<64x128xf32>, vector<4x128xf32> -> vector<4x128xf32>
    %c0_15 = arith.constant 0 : index
    %c0_16 = arith.constant 0 : index
    %17 = vector.load %arg7[%c0_15, %c0_16] : memref<1x128xf32, #tpu.memory_space<vmem>>, vector<1x128xf32>
    %18 = vector.broadcast %17 : vector<1x128xf32> to vector<4x128xf32>
    %19 = arith.addf %16, %18 : vector<4x128xf32>
    %c0_17 = arith.constant 0 : index
    %c0_18 = arith.constant 0 : index
    %20 = vector.load %arg8[%c0_17, %c0_18] : memref<4x128xf32, #tpu.memory_space<vmem>>, vector<4x128xf32>
    tpu.vector_store %arg8[%c0_17, %c0_18], %19 {strides = array<i32>} : memref<4x128xf32, #tpu.memory_space<vmem>>, vector<4x128xf32>,
    return
  }
  func.func @transform_0(%arg0: i32) -> (i32, i32) {
    %c0_i32 = arith.constant 0 : i32
    %c0_i32_0 = arith.constant 0 : i32
    return %arg0, %c0_i32 : i32, i32
  }
  func.func @transform_1(%arg0: i32) -> (i32, i32) {
    %c0_i32 = arith.constant 0 : i32
    %c0_i32_0 = arith.constant 0 : i32
    %c0_i32_1 = arith.constant 0 : i32
    return %c0_i32, %c0_i32_0 : i32, i32
  }
  func.func @transform_2(%arg0: i32) -> (i32, i32) {
    %c0_i32 = arith.constant 0 : i32
    %c0_i32_0 = arith.constant 0 : i32
    %c0_i32_1 = arith.constant 0 : i32
    return %c0_i32, %c0_i32_0 : i32, i32
  }
  func.func @transform_3(%arg0: i32) -> (i32, i32) {
    %c0_i32 = arith.constant 0 : i32
    %c0_i32_0 = arith.constant 0 : i32
    %c0_i32_1 = arith.constant 0 : i32
    return %c0_i32, %c0_i32_0 : i32, i32
  }
  func.func @transform_4(%arg0: i32) -> (i32, i32) {
    %c0_i32 = arith.constant 0 : i32
    %c0_i32_0 = arith.constant 0 : i32
    %c0_i32_1 = arith.constant 0 : i32
    return %c0_i32, %c0_i32_0 : i32, i32
  }
  func.func @transform_5(%arg0: i32) -> (i32, i32) {
    %c0_i32 = arith.constant 0 : i32
    %c0_i32_0 = arith.constant 0 : i32
    %c0_i32_1 = arith.constant 0 : i32
    return %c0_i32, %c0_i32_0 : i32, i32
  }
  func.func @transform_6(%arg0: i32) -> (i32, i32) {
    %c0_i32 = arith.constant 0 : i32
    %c0_i32_0 = arith.constant 0 : i32
    %c0_i32_1 = arith.constant 0 : i32
    return %c0_i32, %c0_i32_0 : i32, i32
  }
  func.func @transform_7(%arg0: i32) -> (i32, i32) {
    %c0_i32 = arith.constant 0 : i32
    %c0_i32_0 = arith.constant 0 : i32
    return %arg0, %c0_i32 : i32, i32
  }
}

</mosaic_0001>

<llo_original>
// kernel: tpu_custom_call.1
$region0: #{tpu_custom_call.1}
  #allocation0 [shape = 'u32[]', space=smem, size = 0x4, offset = 0x4, fixed_abs, tag = 'smem constant byte address 0x4 - core index']
  #allocation1 [shape = 'u32[144,128]{1,0:T(1,128)}', space=vmem, size = 0x12000, scoped, tag = 'internal scratch']
  %s0 = inlined_call_operand.hbm [shape: f32[4,16], index: 0, kind: input, shape index: {}]
  %s1 = inlined_call_operand.hbm [shape: f32[16,64], index: 1, kind: input, shape index: {}]
  %s2 = inlined_call_operand.vmem [shape: f32[1,64], index: 2, kind: input, shape index: {}]
  %s3 = inlined_call_operand.hbm [shape: f32[64,64], index: 3, kind: input, shape index: {}]
  %s4 = inlined_call_operand.vmem [shape: f32[1,64], index: 4, kind: input, shape index: {}]
  %s5 = inlined_call_operand.hbm [shape: f32[64,128], index: 5, kind: input, shape index: {}]
  %s6 = inlined_call_operand.vmem [shape: f32[1,128], index: 6, kind: input, shape index: {}]
  %s7 = inlined_call_operand.hbm [shape: f32[4,128], index: 7, kind: output, shape index: {}]
  %s8 = sld [smem:[#allocation0]]
  $region54: #{tpu_custom_call.1} parent=0
    _
  %s10 = ssub.s32 1, %s8
  %s11 = scalar_select 0, %s10, %s8
  $region1: #{tpu_custom_call.1} parent=0
    #allocation2 [shape = 'u8[2048]{0}', space=vmem, size = 0x800, scoped, tag = 'input window, operand 0, single buffered']
    #allocation3 [shape = 's32[1]{0}', space=sflag, size = 0x4, scoped, tag = 'scoped memory for tpu_custom_call.1']
    #allocation4 [shape = 's32[1]{0}', space=sflag, size = 0x4, scoped, tag = 'scoped memory for tpu_custom_call.1']
    #allocation5 [shape = 'u8[8192]{0}', space=vmem, size = 0x2000, scoped, tag = 'input window, operand 1, single buffered']
    #allocation6 [shape = 's32[1]{0}', space=sflag, size = 0x4, scoped, tag = 'scoped memory for tpu_custom_call.1']
    #allocation7 [shape = 'u8[32768]{0}', space=vmem, size = 0x8000, scoped, tag = 'input window, operand 3, single buffered']
    #allocation8 [shape = 'u8[32768]{0}', space=vmem, size = 0x8000, scoped, tag = 'input window, operand 5, single buffered']
    #allocation9 [shape = 's32[1]{0}', space=sflag, size = 0x4, scoped, tag = 'scoped memory for tpu_custom_call.1']
    #allocation10 [shape = 'u8[2048]{0}', space=vmem, size = 0x800, scoped, tag = 'output window, operand 0, single buffered']
    %12 = vsyncpa [#allocation3], 0
    %13 = vsyncpa [#allocation6], 0
    %14 = vsyncpa [#allocation9], 0
    %15 = vsyncpa [#allocation4], 0
    // Predicated region
    $region2: #{tpu_custom_call.1} parent=1 // pred_check
      _
    $region3: #{tpu_custom_call.1} parent=1 // pred_check_branch
      %17 = sbr.rel (0) target = $region5
    $region4: #{tpu_custom_call.1} parent=1 // pred_region
      %s19 = ssub.s32 64, 64
      %20 = vsyncadd [#allocation3], %s19
      %s22 = sshll.u32 [#allocation2], 4
      %s23 = int_to_ptr.vmem [resolvable:$true] %s22
      %25 = dma.hbm_to_vmem [thread:$0]  %s0, 64, %s23, [#allocation3]
    $region5: #{tpu_custom_call.1} parent=1 // pred_fallthru
      _
    // Predicated region
    $region6: #{tpu_custom_call.1} parent=1 // pred_check
      _
    $region7: #{tpu_custom_call.1} parent=1 // pred_check_branch
      %27 = sbr.rel (0) target = $region9
    $region8: #{tpu_custom_call.1} parent=1 // pred_region
      %s29 = ssub.s32 256, 256
      %30 = vsyncadd [#allocation6], %s29
      %s31 = sshll.u32 [#allocation5], 4
      %s32 = int_to_ptr.vmem [resolvable:$true] %s31
      %37 = dma.hbm_to_vmem [thread:$0]  %s1, 256, %s32, [#allocation6], 128, 128, 8
    $region9: #{tpu_custom_call.1} parent=1 // pred_fallthru
      _
    // Predicated region
    $region10: #{tpu_custom_call.1} parent=1 // pred_check
      _
    $region11: #{tpu_custom_call.1} parent=1 // pred_check_branch
      %39 = sbr.rel (0) target = $region13
    $region12: #{tpu_custom_call.1} parent=1 // pred_region
      _
    $region13: #{tpu_custom_call.1} parent=1 // pred_fallthru
      _
    // Predicated region
    $region14: #{tpu_custom_call.1} parent=1 // pred_check
      _
    $region15: #{tpu_custom_call.1} parent=1 // pred_check_branch
      %41 = sbr.rel (0) target = $region17
    $region16: #{tpu_custom_call.1} parent=1 // pred_region
      %s43 = ssub.s32 1024, 1024
      %44 = vsyncadd [#allocation6], %s43
      %s45 = sshll.u32 [#allocation7], 4
      %s46 = int_to_ptr.vmem [resolvable:$true] %s45
      %51 = dma.hbm_to_vmem [thread:$0]  %s3, 1024, %s46, [#allocation6], 128, 128, 8
    $region17: #{tpu_custom_call.1} parent=1 // pred_fallthru
      _
    // Predicated region
    $region18: #{tpu_custom_call.1} parent=1 // pred_check
      _
    $region19: #{tpu_custom_call.1} parent=1 // pred_check_branch
      %53 = sbr.rel (0) target = $region21
    $region20: #{tpu_custom_call.1} parent=1 // pred_region
      _
    $region21: #{tpu_custom_call.1} parent=1 // pred_fallthru
      _
    // Predicated region
    $region22: #{tpu_custom_call.1} parent=1 // pred_check
      _
    $region23: #{tpu_custom_call.1} parent=1 // pred_check_branch
      %55 = sbr.rel (0) target = $region25
    $region24: #{tpu_custom_call.1} parent=1 // pred_region
      %s57 = ssub.s32 1024, 1024
      %58 = vsyncadd [#allocation9], %s57
      %s59 = sshll.u32 [#allocation8], 4
      %s60 = int_to_ptr.vmem [resolvable:$true] %s59
      %65 = dma.hbm_to_vmem [thread:$0]  %s5, 1024, %s60, [#allocation9], 128, 128, 8
    $region25: #{tpu_custom_call.1} parent=1 // pred_fallthru
      _
    // Predicated region
    $region26: #{tpu_custom_call.1} parent=1 // pred_check
      _
    $region27: #{tpu_custom_call.1} parent=1 // pred_check_branch
      %67 = sbr.rel (0) target = $region29
    $region28: #{tpu_custom_call.1} parent=1 // pred_region
      _
    $region29: #{tpu_custom_call.1} parent=1 // pred_fallthru
      _
    // Predicated region
    $region30: #{tpu_custom_call.1} parent=1 // pred_check
      _
    $region31: #{tpu_custom_call.1} parent=1 // pred_check_branch
      %69 = sbr.rel (0) target = $region33
    $region32: #{tpu_custom_call.1} parent=1 // pred_region
      %70 = dma.done [#allocation3], 64
    $region33: #{tpu_custom_call.1} parent=1 // pred_fallthru
      _
    // Predicated region
    $region34: #{tpu_custom_call.1} parent=1 // pred_check
      _
    $region35: #{tpu_custom_call.1} parent=1 // pred_check_branch
      %72 = sbr.rel (0) target = $region37
    $region36: #{tpu_custom_call.1} parent=1 // pred_region
      %73 = dma.done [#allocation6], 256
    $region37: #{tpu_custom_call.1} parent=1 // pred_fallthru
      _
    // Predicated region
    $region38: #{tpu_custom_call.1} parent=1 // pred_check
      _
    $region39: #{tpu_custom_call.1} parent=1 // pred_check_branch
      %75 = sbr.rel (0) target = $region41
    $region40: #{tpu_custom_call.1} parent=1 // pred_region
      %76 = dma.done [#allocation6], 1024
    $region41: #{tpu_custom_call.1} parent=1 // pred_fallthru
      _
    // Predicated region
    $region42: #{tpu_custom_call.1} parent=1 // pred_check
      _
    $region43: #{tpu_custom_call.1} parent=1 // pred_check_branch
      %78 = sbr.rel (0) target = $region45
    $region44: #{tpu_custom_call.1} parent=1 // pred_region
      %79 = dma.done [#allocation9], 1024
    $region45: #{tpu_custom_call.1} parent=1 // pred_fallthru
      _
    %v80 = vld [vmem:[#allocation2] sm:$0xf]
    %v81 = vld [vmem:[#allocation5] sm:$0xff]
    %v82 = vld [vmem:[#allocation5 + $0x8] sm:$0xff]
    %v83 = vld [vmem:[%s2] sm:$0x1]
    %v85 = vlaneseq
    %v86 = vshrl.u32 %v85, 7
    %v87 = vsub.s32 0, %v86
    %v88 = vrot.slane %v83, %v87
    %vm90 = vcmask 130048
    %v92 = vsel %vm90, %v80, 0
    %94 = vmatprep.subr.mxu0 0.0
    %95 = vmatpush1.msra.mxu0 %v81
    %96 = vmatprep.subr.mxu0 0.0
    %97 = vmatpush1.msra.mxu0 %v82
    %98 = vmatprep.subr.mxu0 0.0
    %99 = vmatpush1.msra.mxu0 0.0
    %100 = vmatprep.subr.mxu0 0.0
    %101 = vmatpush1.msra.mxu0 0.0
    %102 = vmatprep.subr.mxu0 0.0
    %103 = vmatpush1.msra.mxu0 0.0
    %104 = vmatprep.subr.mxu0 0.0
    %105 = vmatpush1.msra.mxu0 0.0
    %106 = vmatprep.subr.mxu0 0.0
    %107 = vmatpush1.msra.mxu0 0.0
    %108 = vmatprep.subr.mxu0 0.0
    %109 = vmatpush1.msra.mxu0 0.0
    %110 = vmatprep.subr.mxu0 0.0
    %111 = vmatpush1.msra.mxu0 0.0
    %112 = vmatprep.subr.mxu0 0.0
    %113 = vmatpush1.msra.mxu0 0.0
    %114 = vmatprep.subr.mxu0 0.0
    %115 = vmatpush1.msra.mxu0 0.0
    %116 = vmatprep.subr.mxu0 0.0
    %117 = vmatpush1.msra.mxu0 0.0
    %118 = vmatprep.subr.mxu0 0.0
    %119 = vmatpush1.msra.mxu0 0.0
    %120 = vmatprep.subr.mxu0 0.0
    %121 = vmatpush1.msra.mxu0 0.0
    %122 = vmatprep.subr.mxu0 0.0
    %123 = vmatpush1.msra.mxu0 0.0
    %124 = vmatprep.subr.mxu0 0.0
    %125 = vmatpush1.msra.mxu0 0.0
    %126 = vmatprep.subr.mxu0 0.0
    %127 = vmatpush1.msra.mxu0 0.0
    %128 = vmatprep.subr.mxu0 0.0
    %129 = vmatpush1.msra.mxu0 0.0
    %130 = vmatprep.subr.mxu0 0.0
    %131 = vmatpush1.msra.mxu0 0.0
    %132 = vmatprep.subr.mxu0 0.0
    %133 = vmatpush1.msra.mxu0 0.0
    %134 = vmatprep.subr.mxu0 0.0
    %135 = vmatpush1.msra.mxu0 0.0
    %136 = vmatprep.subr.mxu0 0.0
    %137 = vmatpush1.msra.mxu0 0.0
    %138 = vmatprep.subr.mxu0 0.0
    %139 = vmatpush1.msra.mxu0 0.0
    %140 = vmatprep.subr.mxu0 0.0
    %141 = vmatpush1.msra.mxu0 0.0
    %142 = vmatprep.subr.mxu0 0.0
    %143 = vmatpush1.msra.mxu0 0.0
    %144 = vmatprep.subr.mxu0 0.0
    %145 = vmatpush1.msra.mxu0 0.0
    %146 = vmatprep.subr.mxu0 0.0
    %147 = vmatpush1.msra.mxu0 0.0
    %148 = vmatprep.subr.mxu0 0.0
    %149 = vmatpush1.msra.mxu0 0.0
    %150 = vmatprep.subr.mxu0 0.0
    %151 = vmatpush1.msra.mxu0 0.0
    %152 = vmatprep.subr.mxu0 0.0
    %153 = vmatpush1.msra.mxu0 0.0
    %154 = vmatprep.subr.mxu0 0.0
    %155 = vmatpush1.msra.mxu0 0.0
    %156 = vmatprep.subr.mxu0 0.0
    %157 = vmatpush1.msra.mxu0 0.0
    %158 = vmatprep.mubr.f32.mxu0 0.0
    %159 = vmatmul.mubr.f32.gmra.mrb[0].mxu0 %v92
    %v160 = vpop.f32.mrb[0].mxu0
    %v161 = vadd.f32 %v88, %v160
    %v162 = vpop.f32.mrb[0].mxu0
    %163 = vdwg.mxu0
    %v164 = vmax.f32 %v161, 0.0
    %v165 = vld [vmem:[#allocation7] sm:$0xff]
    %v166 = vld [vmem:[#allocation7 + $0x8] sm:$0xff]
    %v167 = vld [vmem:[#allocation7 + $0x10] sm:$0xff]
    %v168 = vld [vmem:[#allocation7 + $0x18] sm:$0xff]
    %v169 = vld [vmem:[#allocation7 + $0x20] sm:$0xff]
    %v170 = vld [vmem:[#allocation7 + $0x28] sm:$0xff]
    %v171 = vld [vmem:[#allocation7 + $0x30] sm:$0xff]
    %v172 = vld [vmem:[#allocation7 + $0x38] sm:$0xff]
    %v173 = vld [vmem:[%s4] sm:$0x1]
    %v175 = vlaneseq
    %v176 = vshrl.u32 %v175, 7
    %v177 = vsub.s32 0, %v176
    %v178 = vrot.slane %v173, %v177
    %vm180 = vcmask 523264
    %v182 = vsel %vm180, %v164, 0
    %184 = vmatprep.subr.mxu0 0.0
    %185 = vmatpush1.msra.mxu0 %v165
    %186 = vmatprep.subr.mxu0 0.0
    %187 = vmatpush1.msra.mxu0 %v166
    %188 = vmatprep.subr.mxu0 0.0
    %189 = vmatpush1.msra.mxu0 %v167
    %190 = vmatprep.subr.mxu0 0.0
    %191 = vmatpush1.msra.mxu0 %v168
    %192 = vmatprep.subr.mxu0 0.0
    %193 = vmatpush1.msra.mxu0 %v169
    %194 = vmatprep.subr.mxu0 0.0
    %195 = vmatpush1.msra.mxu0 %v170
    %196 = vmatprep.subr.mxu0 0.0
    %197 = vmatpush1.msra.mxu0 %v171
    %198 = vmatprep.subr.mxu0 0.0
    %199 = vmatpush1.msra.mxu0 %v172
    %200 = vmatprep.subr.mxu0 0.0
    %201 = vmatpush1.msra.mxu0 0.0
    %202 = vmatprep.subr.mxu0 0.0
    %203 = vmatpush1.msra.mxu0 0.0
    %204 = vmatprep.subr.mxu0 0.0
    %205 = vmatpush1.msra.mxu0 0.0
    %206 = vmatprep.subr.mxu0 0.0
    %207 = vmatpush1.msra.mxu0 0.0
    %208 = vmatprep.subr.mxu0 0.0
    %209 = vmatpush1.msra.mxu0 0.0
    %210 = vmatprep.subr.mxu0 0.0
    %211 = vmatpush1.msra.mxu0 0.0
    %212 = vmatprep.subr.mxu0 0.0
    %213 = vmatpush1.msra.mxu0 0.0
    %214 = vmatprep.subr.mxu0 0.0
    %215 = vmatpush1.msra.mxu0 0.0
    %216 = vmatprep.subr.mxu0 0.0
    %217 = vmatpush1.msra.mxu0 0.0
    %218 = vmatprep.subr.mxu0 0.0
    %219 = vmatpush1.msra.mxu0 0.0
    %220 = vmatprep.subr.mxu0 0.0
    %221 = vmatpush1.msra.mxu0 0.0
    %222 = vmatprep.subr.mxu0 0.0
    %223 = vmatpush1.msra.mxu0 0.0
    %224 = vmatprep.subr.mxu0 0.0
    %225 = vmatpush1.msra.mxu0 0.0
    %226 = vmatprep.subr.mxu0 0.0
    %227 = vmatpush1.msra.mxu0 0.0
    %228 = vmatprep.subr.mxu0 0.0
    %229 = vmatpush1.msra.mxu0 0.0
    %230 = vmatprep.subr.mxu0 0.0
    %231 = vmatpush1.msra.mxu0 0.0
    %232 = vmatprep.subr.mxu0 0.0
    %233 = vmatpush1.msra.mxu0 0.0
    %234 = vmatprep.subr.mxu0 0.0
    %235 = vmatpush1.msra.mxu0 0.0
    %236 = vmatprep.subr.mxu0 0.0
    %237 = vmatpush1.msra.mxu0 0.0
    %238 = vmatprep.subr.mxu0 0.0
    %239 = vmatpush1.msra.mxu0 0.0
    %240 = vmatprep.subr.mxu0 0.0
    %241 = vmatpush1.msra.mxu0 0.0
    %242 = vmatprep.subr.mxu0 0.0
    %243 = vmatpush1.msra.mxu0 0.0
    %244 = vmatprep.subr.mxu0 0.0
    %245 = vmatpush1.msra.mxu0 0.0
    %246 = vmatprep.subr.mxu0 0.0
    %247 = vmatpush1.msra.mxu0 0.0
    %248 = vmatprep.mubr.f32.mxu0 0.0
    %249 = vmatmul.mubr.f32.gmra.mrb[0].mxu0 %v182
    %v250 = vpop.f32.mrb[0].mxu0
    %v251 = vadd.f32 %v178, %v250
    %v252 = vpop.f32.mrb[0].mxu0
    %253 = vdwg.mxu0
    %v254 = vmax.f32 %v251, 0.0
    %v255 = vld [vmem:[#allocation8] sm:$0xff]
    %v256 = vld [vmem:[#allocation8 + $0x8] sm:$0xff]
    %v257 = vld [vmem:[#allocation8 + $0x10] sm:$0xff]
    %v258 = vld [vmem:[#allocation8 + $0x18] sm:$0xff]
    %v259 = vld [vmem:[#allocation8 + $0x20] sm:$0xff]
    %v260 = vld [vmem:[#allocation8 + $0x28] sm:$0xff]
    %v261 = vld [vmem:[#allocation8 + $0x30] sm:$0xff]
    %v262 = vld [vmem:[#allocation8 + $0x38] sm:$0xff]
    %v263 = vld [vmem:[%s6] sm:$0x1]
    %v265 = vlaneseq
    %v266 = vshrl.u32 %v265, 7
    %v267 = vsub.s32 0, %v266
    %v268 = vrot.slane %v263, %v267
    %v271 = vsel %vm180, %v254, 0
    %273 = vmatprep.subr.mxu0 0.0
    %274 = vmatpush1.msra.mxu0 %v255
    %275 = vmatprep.subr.mxu0 0.0
    %276 = vmatpush1.msra.mxu0 %v256
    %277 = vmatprep.subr.mxu0 0.0
    %278 = vmatpush1.msra.mxu0 %v257
    %279 = vmatprep.subr.mxu0 0.0
    %280 = vmatpush1.msra.mxu0 %v258
    %281 = vmatprep.subr.mxu0 0.0
    %282 = vmatpush1.msra.mxu0 %v259
    %283 = vmatprep.subr.mxu0 0.0
    %284 = vmatpush1.msra.mxu0 %v260
    %285 = vmatprep.subr.mxu0 0.0
    %286 = vmatpush1.msra.mxu0 %v261
    %287 = vmatprep.subr.mxu0 0.0
    %288 = vmatpush1.msra.mxu0 %v262
    %289 = vmatprep.subr.mxu0 0.0
    %290 = vmatpush1.msra.mxu0 0.0
    %291 = vmatprep.subr.mxu0 0.0
    %292 = vmatpush1.msra.mxu0 0.0
    %293 = vmatprep.subr.mxu0 0.0
    %294 = vmatpush1.msra.mxu0 0.0
    %295 = vmatprep.subr.mxu0 0.0
    %296 = vmatpush1.msra.mxu0 0.0
    %297 = vmatprep.subr.mxu0 0.0
    %298 = vmatpush1.msra.mxu0 0.0
    %299 = vmatprep.subr.mxu0 0.0
    %300 = vmatpush1.msra.mxu0 0.0
    %301 = vmatprep.subr.mxu0 0.0
    %302 = vmatpush1.msra.mxu0 0.0
    %303 = vmatprep.subr.mxu0 0.0
    %304 = vmatpush1.msra.mxu0 0.0
    %305 = vmatprep.subr.mxu0 0.0
    %306 = vmatpush1.msra.mxu0 0.0
    %307 = vmatprep.subr.mxu0 0.0
    %308 = vmatpush1.msra.mxu0 0.0
    %309 = vmatprep.subr.mxu0 0.0
    %310 = vmatpush1.msra.mxu0 0.0
    %311 = vmatprep.subr.mxu0 0.0
    %312 = vmatpush1.msra.mxu0 0.0
    %313 = vmatprep.subr.mxu0 0.0
    %314 = vmatpush1.msra.mxu0 0.0
    %315 = vmatprep.subr.mxu0 0.0
    %316 = vmatpush1.msra.mxu0 0.0
    %317 = vmatprep.subr.mxu0 0.0
    %318 = vmatpush1.msra.mxu0 0.0
    %319 = vmatprep.subr.mxu0 0.0
    %320 = vmatpush1.msra.mxu0 0.0
    %321 = vmatprep.subr.mxu0 0.0
    %322 = vmatpush1.msra.mxu0 0.0
    %323 = vmatprep.subr.mxu0 0.0
    %324 = vmatpush1.msra.mxu0 0.0
    %325 = vmatprep.subr.mxu0 0.0
    %326 = vmatpush1.msra.mxu0 0.0
    %327 = vmatprep.subr.mxu0 0.0
    %328 = vmatpush1.msra.mxu0 0.0
    %329 = vmatprep.subr.mxu0 0.0
    %330 = vmatpush1.msra.mxu0 0.0
    %331 = vmatprep.subr.mxu0 0.0
    %332 = vmatpush1.msra.mxu0 0.0
    %333 = vmatprep.subr.mxu0 0.0
    %334 = vmatpush1.msra.mxu0 0.0
    %335 = vmatprep.subr.mxu0 0.0
    %336 = vmatpush1.msra.mxu0 0.0
    %337 = vmatprep.mubr.f32.mxu0 0.0
    %338 = vmatmul.mubr.f32.gmra.mrb[0].mxu0 %v271
    %v339 = vpop.f32.mrb[0].mxu0
    %v340 = vadd.f32 %v268, %v339
    %v341 = vpop.f32.mrb[0].mxu0
    %342 = vdwg.mxu0
    %343 = vst [vmem:[#allocation10] sm:$0xf] %v340
    // Predicated region
    $region46: #{tpu_custom_call.1} parent=1 // pred_check
      _
    $region47: #{tpu_custom_call.1} parent=1 // pred_check_branch
      %345 = sbr.rel (0) target = $region49
    $region48: #{tpu_custom_call.1} parent=1 // pred_region
      %s347 = ssub.s32 64, 64
      %348 = vsyncadd [#allocation4], %s347
      %s350 = sshll.u32 [#allocation10], 4
      %s351 = int_to_ptr.vmem [resolvable:$true] %s350
      %353 = dma.vmem_to_hbm [thread:$0]  %s351, 64, %s7, [#allocation4]
    $region49: #{tpu_custom_call.1} parent=1 // pred_fallthru
      _
    // Predicated region
    $region50: #{tpu_custom_call.1} parent=1 // pred_check
      _
    $region51: #{tpu_custom_call.1} parent=1 // pred_check_branch
      %355 = sbr.rel (0) target = $region53
    $region52: #{tpu_custom_call.1} parent=1 // pred_region
      %356 = dma.done [#allocation4], 64
    $region53: #{tpu_custom_call.1} parent=1 // pred_fallthru
      _
    %357 = vsyncpa [#allocation3], 1
    %358 = vsyncpa [#allocation6], 1
    %359 = vsyncpa [#allocation9], 1
    %360 = vsyncpa [#allocation4], 1

</llo_original>
